<compile_context>
chip_gen: v5e
topology: v5e:2x2
jax: 0.10.0
libtpu: 0.0.40
codegen_flags: <defaults>
</compile_context>

<pallas_src>
import jax
import jax.numpy as jnp
from jax.experimental import pallas as pl
from jax.experimental.pallas import tpu as pltpu


def _grad_kernel(scal_ref, hz_ref, ms_ref, grad_ref):
    """scal_ref: SMEM (1 + num_tiles,) f32 = [hz0, carry(tile 0), carry(tile 1), ...]
       hz_ref:   VMEM (tile_rows, 128) f32 dense tile (row-major element order)
       ms_ref:   VMEM (tile_rows, 128) f32 dense tile
       grad_ref: VMEM (tile_rows, 128) f32 dense tile
    """
    i = pl.program_id(0)

    hz = hz_ref[...]
    ms = ms_ref[...]

    # prev_ms: element (r, l) needs ms[r, l-1]; at l == 0 it needs ms[r-1, 127];
    # at (0, 0) it needs the carried-in boundary value (last ms of the previous
    # tile, 0 for the very first tile).  Both rolls are XLU-slot work.
    prev_lane = pltpu.roll(ms, shift=1, axis=1)          # (r, l) <- ms[r, (l-1)%128]
    prev_both = pltpu.roll(prev_lane, shift=1, axis=0)   # (r, 0) <- ms[r-1, 127]
    lane = jax.lax.broadcasted_iota(jnp.int32, ms.shape, 1)
    row = jax.lax.broadcasted_iota(jnp.int32, ms.shape, 0)
    carry = scal_ref[1 + i]                              # boundary ms from SMEM
    prev_ms = jnp.where(lane == 0,
                        jnp.where(row == 0, carry, prev_both),
                        prev_lane)

    dms = ms - prev_ms
    hz0 = scal_ref[0]                    # arr[0][0], pinned (original-module typo)
    is_zero = dms == 0.0
    safe_dms = jnp.where(is_zero, jnp.float32(1.0), dms)
    # NOTE: padded lanes/rows of a partial last tile compute garbage here
    # (possibly inf/NaN) — harmless on TPU (no FP traps) and discarded by the
    # masked writeback / the final [:n] slice in the wrapper.  Do not "fix"
    # this into a masked read.  Single dense full-block store:
    grad_ref[...] = jnp.where(is_zero, jnp.float32(0.0), (hz - hz0) / safe_dms)


def array_to_data_layer_split(hz: jax.Array, ms: jax.Array, *, tile_rows: int = 4096):
    """hz, ms: contiguous (N,) streams.  Returns (hz, ms, grad), each (N,) f32."""
    hz = hz.astype(jnp.float32)
    ms = ms.astype(jnp.float32)
    n = hz.shape[0]

    n_rows = pl.cdiv(n, 128)
    padded = n_rows * 128
    if padded != n:
        hz_p = jnp.pad(hz, (0, padded - n))
        ms_p = jnp.pad(ms, (0, padded - n))
    else:
        hz_p, ms_p = hz, ms
    hz2 = hz_p.reshape(n_rows, 128)
    ms2 = ms_p.reshape(n_rows, 128)

    if n_rows <= tile_rows:
        t_rows = n_rows          # single full-extent block (no 8-divisibility needed)
        num_tiles = 1
    else:
        t_rows = tile_rows       # multiple of 8; partial last block handled by Pallas
        num_tiles = pl.cdiv(n_rows, t_rows)

    # SMEM scalars: [hz0, carry_0, ..., carry_{num_tiles-1}] where carry_i is
    # the ms of the last element of tile i-1 (0 for tile 0).
    tile_elems = t_rows * 128
    if num_tiles > 1:
        carries = jnp.concatenate([
            jnp.zeros((1,), jnp.float32),
            ms[tile_elems - 1 :: tile_elems][: num_tiles - 1],
        ])
    else:
        carries = jnp.zeros((1,), jnp.float32)
    scalars = jnp.concatenate([hz[0:1], carries])        # (1 + num_tiles,)

    grad_tiles = pl.pallas_call(
        _grad_kernel,
        out_shape=jax.ShapeDtypeStruct((n_rows, 128), jnp.float32),
        grid=(num_tiles,),
        in_specs=[
            pl.BlockSpec(memory_space=pltpu.MemorySpace.SMEM),    # scalars, whole array
            pl.BlockSpec((t_rows, 128), lambda i: (i, 0)),        # hz tile (dense)
            pl.BlockSpec((t_rows, 128), lambda i: (i, 0)),        # ms tile (dense)
        ],
        out_specs=pl.BlockSpec((t_rows, 128), lambda i: (i, 0)),  # grad tile (dense)
        compiler_params=pltpu.CompilerParams(
            dimension_semantics=("parallel",),        # tiles fully independent
            vmem_limit_bytes=32 * 1024 * 1024,        # headroom for large tiles
        ),
    )(scalars, hz2, ms2)

    grad = grad_tiles.reshape(-1)[:n]
    return hz, ms, grad


def array_to_data_layer(arr: jax.Array, *, tile_rows: int = 4096):
    """arr: (N, 2) f32 [Hz, ms]  ->  (hz, ms, grad), each (N,) f32.

    Column i of stack([hz, ms, grad]) is the i-th (Hz, ms, grad) tuple of the
    PyTorch module.  Hz and ms are passed through untouched; only grad goes
    through the kernel.
    """
    arr = arr.astype(jnp.float32)
    hz = arr[:, 0]     # one fused de-interleave pass (XLA fuses both column slices)
    ms = arr[:, 1]
    return array_to_data_layer_split(hz, ms, tile_rows=tile_rows)


def _reference(arr) -> jax.Array:
    """Pure-Python re-implementation of the (buggy) PyTorch forward, as a (3, N) slab."""
    arr = jnp.asarray(arr, jnp.float32)
    rows = []
    last_hz = float(arr[0, 0])      # never updated (typo in the original module)
    last_ms = 0.0
    for hz, ms in [(float(a), float(b)) for a, b in arr.tolist()]:
        d = ms - last_ms
        grad = 0.0 if d == 0.0 else (hz - last_hz) / d
        rows.append((hz, ms, grad))
        last_ms = ms
    return jnp.array(rows, jnp.float32).T   # (3, N)


if __name__ == "__main__":
    key = jax.random.PRNGKey(0)
    k_hz, k_dms, k_hz2, k_dms2 = jax.random.split(key, 4)

    # --- small case (single tile: one padded (1, 128) row) ---
    n = 8
    hz = jax.random.uniform(k_hz, (n,), jnp.float32, minval=100.0, maxval=1000.0)
    dms = jax.random.uniform(k_dms, (n,), jnp.float32, minval=1.0, maxval=10.0)
    ms = jnp.cumsum(dms)
    ms = ms.at[5].set(ms[4])              # repeated timestamp -> grad == 0 branch
    arr = jnp.stack([hz, ms], axis=1)     # (N, 2) [Hz, ms]

    out = jax.block_until_ready(array_to_data_layer(arr))
    got = jnp.stack(out)                  # (3, N)
    ref = _reference(arr)
    assert got.shape == (3, n)
    assert jnp.allclose(got, ref, rtol=1e-5, atol=1e-5), (got, ref)

    # --- multi-tile case: cross-row (sublane) + cross-tile prev_ms carries,
    #     partial last tile (rows 20..23 padded), partial last row (lanes),
    #     grad == 0 exactly at a row boundary and at a tile boundary ---
    n2 = 2500                              # 20 rows of 128 -> 3 tiles of 8 rows
    hz2 = jax.random.uniform(k_hz2, (n2,), jnp.float32, minval=100.0, maxval=1000.0)
    dms2 = jax.random.uniform(k_dms2, (n2,), jnp.float32, minval=1.0, maxval=10.0)
    ms2 = jnp.cumsum(dms2)
    ms2 = ms2.at[384].set(ms2[383])        # dms == 0 across a row (sublane) boundary
    ms2 = ms2.at[1024].set(ms2[1023])      # dms == 0 across a tile boundary
    arr2 = jnp.stack([hz2, ms2], axis=1)

    out2 = jax.block_until_ready(array_to_data_layer(arr2, tile_rows=8))
    got2 = jnp.stack(out2)
    ref2 = _reference(arr2)
    assert got2.shape == (3, n2)
    assert jnp.allclose(got2, ref2, rtol=1e-5, atol=1e-5), (got2, ref2)

    print("KERNEL_OK")
</pallas_src>

<mosaic_0001>
module attributes {stable_mosaic.version = 11 : i64} {
  func.func @_grad_kernel(%arg0: i32, %arg1: memref<2xf32, #tpu.memory_space<smem>>, %arg2: memref<1x128xf32, #tpu.memory_space<vmem>>, %arg3: memref<1x128xf32, #tpu.memory_space<vmem>>, %arg4: memref<1x128xf32, #tpu.memory_space<vmem>>) attributes {dimension_semantics = [#tpu.dimension_semantics<parallel>], iteration_bounds = array<i64: 1>, scalar_prefetch = 0 : i64, scratch_operands = 0 : i64, tpu.core_type = #tpu.core_type<tc>, window_params = [{transform_indices = @transform_0, window_bounds = array<i64: 2>}, {transform_indices = @transform_1, window_bounds = array<i64: 1, 128>}, {transform_indices = @transform_2, window_bounds = array<i64: 1, 128>}, {transform_indices = @transform_3, window_bounds = array<i64: 1, 128>}]} {
    %c0 = arith.constant 0 : index
    %c0_0 = arith.constant 0 : index
    %0 = vector.load %arg2[%c0, %c0_0] : memref<1x128xf32, #tpu.memory_space<vmem>>, vector<1x128xf32>
    %c0_1 = arith.constant 0 : index
    %c0_2 = arith.constant 0 : index
    %1 = vector.load %arg3[%c0_1, %c0_2] : memref<1x128xf32, #tpu.memory_space<vmem>>, vector<1x128xf32>
    %c1_i32 = arith.constant 1 : i32
    %2 = tpu.dynamic_rotate %1 by %c1_i32 dim 1 : vector<1x128xf32>, i32 -> vector<1x128xf32>
    %c1_i32_3 = arith.constant 1 : i32
    %3 = tpu.dynamic_rotate %2 by %c1_i32_3 dim 0 : vector<1x128xf32>, i32 -> vector<1x128xf32>
    %4 = tpu.iota {dimensions = array<i32: 1>} : vector<1x128xi32>
    %5 = tpu.iota {dimensions = array<i32: 0>} : vector<1x128xi32>
    %c1_i32_4 = arith.constant 1 : i32
    %6 = arith.addi %c1_i32_4, %arg0 : i32
    %7 = arith.index_cast %6 : i32 to index
    %8 = memref.load %arg1[%7] : memref<2xf32, #tpu.memory_space<smem>>
    %c0_i32 = arith.constant 0 : i32
    %9 = vector.broadcast %c0_i32 : i32 to vector<1x128xi32>
    %10 = arith.cmpi eq, %4, %9 : vector<1x128xi32>
    %c0_i32_5 = arith.constant 0 : i32
    %11 = vector.broadcast %c0_i32_5 : i32 to vector<1x128xi32>
    %12 = arith.cmpi eq, %5, %11 : vector<1x128xi32>
    %13 = vector.broadcast %8 : f32 to vector<1x128xf32>
    %14 = arith.select %12, %13, %3 : vector<1x128xi1>, vector<1x128xf32>
    %15 = arith.select %10, %14, %2 : vector<1x128xi1>, vector<1x128xf32>
    %16 = arith.subf %1, %15 : vector<1x128xf32>
    %c0_6 = arith.constant 0 : index
    %17 = memref.load %arg1[%c0_6] : memref<2xf32, #tpu.memory_space<smem>>
    %cst = arith.constant 0.000000e+00 : f32
    %18 = vector.broadcast %cst : f32 to vector<1x128xf32>
    %19 = arith.cmpf oeq, %16, %18 : vector<1x128xf32>
    %cst_7 = arith.constant 1.000000e+00 : f32
    %20 = vector.broadcast %cst_7 : f32 to vector<1x128xf32>
    %21 = arith.select %19, %20, %16 : vector<1x128xi1>, vector<1x128xf32>
    %22 = vector.broadcast %17 : f32 to vector<1x128xf32>
    %23 = arith.subf %0, %22 : vector<1x128xf32>
    %24 = arith.divf %23, %21 : vector<1x128xf32>
    %cst_8 = arith.constant 0.000000e+00 : f32
    %25 = vector.broadcast %cst_8 : f32 to vector<1x128xf32>
    %26 = arith.select %19, %25, %24 : vector<1x128xi1>, vector<1x128xf32>
    %c0_9 = arith.constant 0 : index
    %c0_10 = arith.constant 0 : index
    %27 = vector.load %arg4[%c0_9, %c0_10] : memref<1x128xf32, #tpu.memory_space<vmem>>, vector<1x128xf32>
    tpu.vector_store %arg4[%c0_9, %c0_10], %26 {strides = array<i32>} : memref<1x128xf32, #tpu.memory_space<vmem>>, vector<1x128xf32>,
    return
  }
  func.func @transform_0(%arg0: i32) -> i32 {
    %c0_i32 = arith.constant 0 : i32
    %c0_i32_0 = arith.constant 0 : i32
    return %c0_i32 : i32
  }
  func.func @transform_1(%arg0: i32) -> (i32, i32) {
    %c0_i32 = arith.constant 0 : i32
    %c0_i32_0 = arith.constant 0 : i32
    return %arg0, %c0_i32 : i32, i32
  }
  func.func @transform_2(%arg0: i32) -> (i32, i32) {
    %c0_i32 = arith.constant 0 : i32
    %c0_i32_0 = arith.constant 0 : i32
    return %arg0, %c0_i32 : i32, i32
  }
  func.func @transform_3(%arg0: i32) -> (i32, i32) {
    %c0_i32 = arith.constant 0 : i32
    %c0_i32_0 = arith.constant 0 : i32
    return %arg0, %c0_i32 : i32, i32
  }
}

</mosaic_0001>

<llo_original>
// kernel: tpu_custom_call.1
$region0: #{tpu_custom_call.1}
  #allocation0 [shape = 'u32[]', space=smem, size = 0x4, offset = 0x4, fixed_abs, tag = 'smem constant byte address 0x4 - core index']
  #allocation1 [shape = 'u32[72,128]{1,0:T(1,128)}', space=vmem, size = 0x9000, scoped, tag = 'internal scratch']
  %s0 = inlined_call_operand.hbm [shape: f32[2], index: 0, kind: input, shape index: {}]
  %s1 = inlined_call_operand.hbm [shape: f32[1,128], index: 1, kind: input, shape index: {}]
  %s2 = inlined_call_operand.vmem [shape: f32[1,128], index: 2, kind: input, shape index: {}]
  %s3 = inlined_call_operand.hbm [shape: f32[1,128], index: 3, kind: output, shape index: {}]
  %s4 = sld [smem:[#allocation0]]
  $region30: #{tpu_custom_call.1} parent=0
    _
  %s6 = ssub.s32 1, %s4
  %s7 = scalar_select 0, %s6, %s4
  $region1: #{tpu_custom_call.1} parent=0
    #allocation2 [shape = 'u8[512]{0}', space=smem, size = 0x200, scoped, tag = 'input window, operand 0, single buffered']
    #allocation3 [shape = 's32[1]{0}', space=sflag, size = 0x4, scoped, tag = 'scoped memory for tpu_custom_call.1']
    #allocation4 [shape = 's32[1]{0}', space=sflag, size = 0x4, scoped, tag = 'scoped memory for tpu_custom_call.1']
    #allocation5 [shape = 's32[1]{0}', space=sflag, size = 0x4, scoped, tag = 'scoped memory for tpu_custom_call.1']
    #allocation6 [shape = 'u8[512]{0}', space=vmem, size = 0x400, scoped, tag = 'input window, operand 1, single buffered']
    #allocation7 [shape = 'u8[512]{0}', space=vmem, size = 0x400, scoped, tag = 'output window, operand 0, single buffered']
    %8 = vsyncpa [#allocation5], 0
    %9 = vsyncpa [#allocation3], 0
    %10 = vsyncpa [#allocation4], 0
    // Predicated region
    $region2: #{tpu_custom_call.1} parent=1 // pred_check
      _
    $region3: #{tpu_custom_call.1} parent=1 // pred_check_branch
      %12 = sbr.rel (0) target = $region5
    $region4: #{tpu_custom_call.1} parent=1 // pred_region
      %14 = vsyncadd [#allocation5], 0
      %s16 = sshll.u32 %s0, 4
      %s17 = int_to_ptr.hbm [resolvable:$true] %s16
      %19 = dma.hbm_to_smem %s17, 16, [#allocation2], [#allocation5]
    $region5: #{tpu_custom_call.1} parent=1 // pred_fallthru
      _
    // Predicated region
    $region6: #{tpu_custom_call.1} parent=1 // pred_check
      _
    $region7: #{tpu_custom_call.1} parent=1 // pred_check_branch
      %21 = sbr.rel (0) target = $region9
    $region8: #{tpu_custom_call.1} parent=1 // pred_region
      %23 = vsyncadd [#allocation3], 0
      %s25 = sshll.u32 %s1, 4
      %s26 = int_to_ptr.hbm [resolvable:$true] %s25
      %s27 = sshll.u32 [#allocation6], 4
      %s28 = int_to_ptr.vmem [resolvable:$true] %s27
      %30 = dma.hbm_to_vmem [thread:$0]  %s26, 16, %s28, [#allocation3]
    $region9: #{tpu_custom_call.1} parent=1 // pred_fallthru
      _
    // Predicated region
    $region10: #{tpu_custom_call.1} parent=1 // pred_check
      _
    $region11: #{tpu_custom_call.1} parent=1 // pred_check_branch
      %32 = sbr.rel (0) target = $region13
    $region12: #{tpu_custom_call.1} parent=1 // pred_region
      _
    $region13: #{tpu_custom_call.1} parent=1 // pred_fallthru
      _
    // Predicated region
    $region14: #{tpu_custom_call.1} parent=1 // pred_check
      _
    $region15: #{tpu_custom_call.1} parent=1 // pred_check_branch
      %34 = sbr.rel (0) target = $region17
    $region16: #{tpu_custom_call.1} parent=1 // pred_region
      %36 = dma.done [#allocation5], 16
    $region17: #{tpu_custom_call.1} parent=1 // pred_fallthru
      _
    // Predicated region
    $region18: #{tpu_custom_call.1} parent=1 // pred_check
      _
    $region19: #{tpu_custom_call.1} parent=1 // pred_check_branch
      %38 = sbr.rel (0) target = $region21
    $region20: #{tpu_custom_call.1} parent=1 // pred_region
      %40 = dma.done [#allocation3], 16
    $region21: #{tpu_custom_call.1} parent=1 // pred_fallthru
      _
    %41 = sfence
    %v42 = vld [vmem:[#allocation6] sm:$0x1]
    %v43 = vld [vmem:[%s2] sm:$0x1]
    %44 = vrot.lane.b32.xlu0 %v43, 1
    %v45 = vpop.permute.xlu0 %44
    %vm46 = vcmask 1047553
    %v47 = vrot.slane %v45, 7
    %v48 = vsel %vm46, %v47, %v45
    %v49 = vrot.slane %v48, 7
    %v50 = vsel %vm46, %v49, %v45
    %v51 = vlaneseq
    %v52 = vand.u32 %v51, 127
    %v53 = vlaneseq
    %v54 = vshrl.u32 %v53, 7
    %s55 = sadd.s32 0, 1
    %s56 = sld [smem:[#allocation2 + %s55]]
    %vm57 = vcmp.eq.s32.totalorder %v52, 0
    %vm58 = vcmp.eq.s32.totalorder %v54, 0
    %v59 = vstv %s56
    %v61 = vrot.slane %v50, 1
    %v63 = vsel %vm58, %v59, %v61
    %v64 = vsel %vm57, %v63, %v45
    %v65 = vsub.f32 %v43, %v64
    %s66 = sld [smem:[#allocation2]]
    %vm67 = vcmp.eq.f32.partialorder %v65, 0.0
    %v68 = vsel %vm67, 1.0, %v65
    %v69 = vstv %s66
    %v70 = vsub.f32 %v42, %v69
    %v71 = vrcp.pop %v68
    %v72 = vmul.f32 %v68, %v71
    %v73 = vsub.f32 1.0, %v72
    %v74 = vmul.f32 %v71, %v73
    %v75 = vadd.f32 %v71, %v74
    %vm76 = vweird.f32 %v68
    %vm77 = vweird.f32 %v71
    %vm78 = vmor %vm76, %vm77
    %v79 = vsel %vm78, %v71, %v75
    %v80 = vand.u32 2147483647, %v68
    %vm81 = vcmp.eq.f32.partialorder %v80, 8.507059e+37
    %v82 = vand.u32 %v68, 2147483648
    %v83 = vor.u32 1.1754944e-38, %v82
    %v84 = vsel %vm81, %v83, %v79
    %v85 = vmul.f32 %v70, %v84
    %v86 = vsel %vm67, 0.0, %v85
    %87 = vst [vmem:[#allocation7] sm:$0x1] %v86
    // Predicated region
    $region22: #{tpu_custom_call.1} parent=1 // pred_check
      _
    $region23: #{tpu_custom_call.1} parent=1 // pred_check_branch
      %89 = sbr.rel (0) target = $region25
    $region24: #{tpu_custom_call.1} parent=1 // pred_region
      %91 = vsyncadd [#allocation4], 0
      %s93 = sshll.u32 [#allocation7], 4
      %s94 = int_to_ptr.vmem [resolvable:$true] %s93
      %s95 = sshll.u32 %s3, 4
      %s96 = int_to_ptr.hbm [resolvable:$true] %s95
      %98 = dma.vmem_to_hbm [thread:$0]  %s94, 16, %s96, [#allocation4]
    $region25: #{tpu_custom_call.1} parent=1 // pred_fallthru
      _
    // Predicated region
    $region26: #{tpu_custom_call.1} parent=1 // pred_check
      _
    $region27: #{tpu_custom_call.1} parent=1 // pred_check_branch
      %100 = sbr.rel (0) target = $region29
    $region28: #{tpu_custom_call.1} parent=1 // pred_region
      %102 = dma.done [#allocation4], 16
    $region29: #{tpu_custom_call.1} parent=1 // pred_fallthru
      _
    %103 = vsyncpa [#allocation3], 1
    %104 = vsyncpa [#allocation4], 1
    %105 = vsyncpa [#allocation5], 1

</llo_original>
